<compile_context>
chip_gen: v7x
topology: tpu7x:2x2x1
jax: 0.10.0
libtpu: 0.0.40
codegen_flags: <defaults>
</compile_context>

<pallas_src>
import functools
import math

import jax
import jax.numpy as jnp
from jax import lax
from jax.experimental import pallas as pl
from jax.experimental.pallas import tpu as pltpu

K = 4            # conv kernel size (fixed by the module)
EPS = 1e-5       # InstanceNorm2d default eps
NEG_SLOPE = 0.2  # LeakyReLU slope
LANE = 128


def _round_up(x, m):
    return (x + m - 1) // m * m


def _vmem_limit_bytes():
    """Per-generation scoped-VMEM limit: ~3/4 of physical, capped 16 MiB below capacity."""
    cap = 0
    try:
        cap = int(pltpu.get_tpu_info().vmem_capacity_bytes)
    except Exception:
        cap = 0
    if cap <= 0:
        cap = 64 * 1024 * 1024          # conservative default (v7x per-TensorCore VMEM)
    return max(32 * 1024 * 1024, min((cap * 3) // 4, cap - (16 << 20)))


# --------------------------------------------------------------------------------------
# Fused path: conv + InstanceNorm + LeakyReLU for one whole sample per grid step.
# --------------------------------------------------------------------------------------
def _fused_kernel(x_ref, w_ref, o_ref, acc_ref, *, k2, h_out, w_out, cin2, cout, cout_p):
    m = h_out * w_out
    acc_ref[...] = jnp.zeros_like(acc_ref)
    for dh in range(k2):
        for dw in range(k2):
            x_tap = x_ref[0, dh:dh + h_out, dw:dw + w_out, :].reshape(m, cin2)
            acc_ref[...] += jnp.dot(x_tap, w_ref[dh, dw],
                                    preferred_element_type=jnp.float32)
    acc = acc_ref[...]                               # (m, cout_p) f32
    inv_n = 1.0 / float(m)
    mean = jnp.sum(acc, axis=0, keepdims=True) * inv_n
    cen = acc - mean
    var = jnp.sum(cen * cen, axis=0, keepdims=True) * inv_n   # centered -> no cancellation
    z = cen * lax.rsqrt(var + EPS)
    z = jnp.where(z > 0, z, NEG_SLOPE * z)
    o_ref[0] = z[:, :cout].reshape(h_out, w_out, cout).astype(o_ref.dtype)


# --------------------------------------------------------------------------------------
# Fallback pass 1: conv (shifted matmuls) + streamed per-sample sum / sum-of-squares
# --------------------------------------------------------------------------------------
def _conv_stats_kernel(*refs, th, k2, w_out, h_out, cin2, cout_p):
    if k2 > 1:
        x_ref, w_ref, xfull_ref, y_ref, st_ref, acc_ref, stage_ref, sem = refs
    else:
        x_ref, w_ref, y_ref, st_ref, acc_ref = refs
        xfull_ref = stage_ref = sem = None

    b = pl.program_id(0)
    t = pl.program_id(1)
    m = th * w_out

    cp = None
    if k2 > 1:
        # (k2-1)-row halo DMA'd straight into the tail of the contiguous staging buffer.
        cp = pltpu.make_async_copy(
            xfull_ref.at[b, pl.ds(t * th + th, k2 - 1)],
            stage_ref.at[pl.ds(th, k2 - 1)],
            sem.at[0])
        cp.start()
        stage_ref[0:th] = x_ref[0]        # bulk rows; overlaps the halo DMA

    acc_ref[...] = jnp.zeros_like(acc_ref)

    if k2 > 1:
        cp.wait()

    for dh in range(k2):
        for dw in range(k2):
            if k2 > 1:
                x_tap = stage_ref[dh:dh + th, dw:dw + w_out, :].reshape(m, cin2)
            else:
                x_tap = x_ref[0, :, 0:w_out, :].reshape(m, cin2)
            acc_ref[...] += jnp.dot(x_tap, w_ref[dh, dw],
                                    preferred_element_type=jnp.float32)

    acc = acc_ref[...]
    # mask rows that fall past H_out (spatial padding in the last tile)
    if h_out % th != 0:
        n_valid = jnp.minimum(th, h_out - t * th) * w_out
        row = lax.broadcasted_iota(jnp.int32, (m, 1), 0)
        acc_m = acc * (row < n_valid).astype(jnp.float32)
    else:
        acc_m = acc
    s1 = jnp.sum(acc_m, axis=0, keepdims=True)            # (1, cout_p) sum
    s2 = jnp.sum(acc_m * acc, axis=0, keepdims=True)      # (1, cout_p) sum of squares
    upd = jnp.concatenate([s1, s2], axis=0)                # (2, cout_p)

    @pl.when(t == 0)
    def _():
        st_ref[0] = upd

    @pl.when(t > 0)
    def _():
        st_ref[0] = st_ref[0] + upd

    y_ref[0, 0] = acc.astype(y_ref.dtype)                  # bf16 intermediate


# --------------------------------------------------------------------------------------
# Fallback pass 2: InstanceNorm (from streamed stats) + LeakyReLU -> unpadded NHWC rows
# --------------------------------------------------------------------------------------
def _norm_lrelu_kernel(y_ref, st_ref, o_ref, *, count, th, w_out, cout):
    y = y_ref[0, 0].astype(jnp.float32)      # (th*w_out, cout_p)
    st = st_ref[0]                           # (2, cout_p) f32
    inv_n = 1.0 / float(count)
    mean = st[0:1, :] * inv_n
    var = jnp.maximum(st[1:2, :] * inv_n - mean * mean, 0.0)
    inv_std = lax.rsqrt(var + EPS)
    z = (y - mean) * inv_std
    z = jnp.where(z > 0, z, NEG_SLOPE * z)
    o_ref[0] = z[:, :cout].reshape(th, w_out, cout).astype(o_ref.dtype)


def _pick_tile_rows(h_out, w_out, w2n, cin2, cout, cout_p, in_bytes, budget):
    per_row = (3 * w2n * cin2 * in_bytes          # input block (dbl buf) + staging
               + 2 * w_out * cout_p * in_bytes    # intermediate block (dbl buf)
               + w_out * cout_p * 4               # f32 accumulator scratch
               + 2 * w_out * cin2 * in_bytes      # per-tap slice temporaries
               + 2 * w_out * cout * 4)            # pass-2 output block (dbl buf)
    th = max(1, min(h_out, budget // per_row))
    step = 8 // math.gcd(w_out, 8)                # make th*w_out a sublane multiple
    if th >= step:
        th = (th // step) * step
    return int(th)


@functools.partial(jax.jit,
                   static_argnames=("stride", "compute_dtype", "force_tile_rows"))
def conv_block(x_nchw, weight_oihw, bias, *, stride, compute_dtype=jnp.bfloat16,
               force_tile_rows=None):
    """ConvBlock forward. x: (N,Cin,H,W); weight: OIHW (Cout,Cin,4,4); bias: (Cout,)."""
    # NOTE: the conv bias is not applied — InstanceNorm2d (affine=False) immediately follows
    # and its output is invariant to per-channel constant offsets, so this is exactly the
    # same forward function (and numerically better for the moment accumulation).
    del bias

    n, cin, h, w = x_nchw.shape
    cout = weight_oihw.shape[0]
    s = int(stride)
    k2 = -(-K // s)                 # taps per axis after folding the stride
    kp = k2 * s

    hp, wp = h + 2, w + 2
    h_out = (hp - K) // s + 1
    w_out = (wp - K) // s + 1
    cin2 = s * s * cin
    cout_p = _round_up(cout, LANE)
    in_bytes = jnp.dtype(compute_dtype).itemsize
    w2n = w_out + k2 - 1
    m_full = h_out * w_out

    vmem_limit = _vmem_limit_bytes()

    # ---- path selection: fully fused (whole sample resident) vs row-tiled two-pass ----
    fused_bytes = (2 * (h_out + k2 - 1) * w2n * cin2 * in_bytes   # input block (dbl buf)
                   + 2 * k2 * k2 * cin2 * cout_p * in_bytes       # weights (dbl buf)
                   + 2 * m_full * cout * 4                        # output block (dbl buf)
                   + m_full * cout_p * 4                          # f32 accumulator scratch
                   + 2 * m_full * cin2 * in_bytes                 # per-tap temporaries
                   + (2 << 20))                                   # slack
    use_fused = (force_tile_rows is None) and (fused_bytes <= vmem_limit)

    if use_fused:
        th, num_t = h_out, 1
    else:
        if force_tile_rows is not None:
            th = max(1, min(int(force_tile_rows), h_out))
        else:
            fixed = 2 * k2 * k2 * cin2 * cout_p * in_bytes
            budget = max(1 << 20, (vmem_limit * 3) // 5 - fixed)
            th = _pick_tile_rows(h_out, w_out, w2n, cin2, cout, cout_p, in_bytes, budget)
        num_t = int(pl.cdiv(h_out, th))
    h2n = num_t * th + (k2 - 1)

    # ---- glue: layout, reflect pad, stride folding (space-to-depth) ----
    x_nhwc = jnp.transpose(x_nchw, (0, 2, 3, 1))
    x_pad = jnp.pad(x_nhwc, ((0, 0), (1, 1), (1, 1), (0, 0)), mode="reflect")
    tgt_h, tgt_w = h2n * s, w2n * s
    x_pad = x_pad[:, :tgt_h, :tgt_w, :]
    x_pad = jnp.pad(x_pad, ((0, 0), (0, tgt_h - x_pad.shape[1]),
                            (0, tgt_w - x_pad.shape[2]), (0, 0)))
    x2 = x_pad.reshape(n, h2n, s, w2n, s, cin)
    x2 = jnp.transpose(x2, (0, 1, 3, 2, 4, 5)).reshape(n, h2n, w2n, cin2)
    x2 = x2.astype(compute_dtype)

    # weights: OIHW -> (k2, k2, cin2, cout_p) with the stride phases folded into cin2
    w_hwio = jnp.transpose(weight_oihw, (2, 3, 1, 0))
    w_hwio = jnp.pad(w_hwio, ((0, kp - K), (0, kp - K), (0, 0), (0, 0)))
    w2 = w_hwio.reshape(k2, s, k2, s, cin, cout)
    w2 = jnp.transpose(w2, (0, 2, 1, 3, 4, 5)).reshape(k2, k2, cin2, cout)
    w2 = jnp.pad(w2, ((0, 0), (0, 0), (0, 0), (0, cout_p - cout))).astype(compute_dtype)

    if use_fused:
        # ---- single fused pass: conv -> moments -> InstanceNorm -> LeakyReLU ----
        kern = functools.partial(_fused_kernel, k2=k2, h_out=h_out, w_out=w_out,
                                 cin2=cin2, cout=cout, cout_p=cout_p)
        flops = int(2 * n * m_full * (k2 * k2 * cin2) * cout_p + 10 * n * m_full * cout_p)
        bytes_acc = int(x2.size * in_bytes + w2.size * in_bytes + n * m_full * cout * 4)
        out_nhwc = pl.pallas_call(
            kern,
            out_shape=jax.ShapeDtypeStruct((n, h_out, w_out, cout), jnp.float32),
            grid_spec=pltpu.PrefetchScalarGridSpec(
                num_scalar_prefetch=0,
                grid=(n,),
                in_specs=[
                    pl.BlockSpec((1, h2n, w2n, cin2), lambda b: (b, 0, 0, 0)),
                    pl.BlockSpec((k2, k2, cin2, cout_p), lambda b: (0, 0, 0, 0)),
                ],
                out_specs=pl.BlockSpec((1, h_out, w_out, cout), lambda b: (b, 0, 0, 0)),
                scratch_shapes=[pltpu.VMEM((m_full, cout_p), jnp.float32)],
            ),
            compiler_params=pltpu.CompilerParams(
                dimension_semantics=("parallel",),
                vmem_limit_bytes=vmem_limit),
            cost_estimate=pl.CostEstimate(flops=flops, transcendentals=n * cout_p,
                                          bytes_accessed=bytes_acc),
        )(x2, w2)
        return jnp.transpose(out_nhwc, (0, 3, 1, 2))

    # ---- fallback: row-tiled two-pass (bf16 intermediate + streamed moments) ----
    m_t = th * w_out

    kern1 = functools.partial(_conv_stats_kernel, th=th, k2=k2, w_out=w_out,
                              h_out=h_out, cin2=cin2, cout_p=cout_p)
    in_specs = [
        pl.BlockSpec((1, th, w2n, cin2), lambda b, t: (b, t, 0, 0)),
        pl.BlockSpec((k2, k2, cin2, cout_p), lambda b, t: (0, 0, 0, 0)),
    ]
    inputs = [x2, w2]
    scratch = [pltpu.VMEM((m_t, cout_p), jnp.float32)]
    if k2 > 1:
        in_specs.append(pl.BlockSpec(memory_space=pl.ANY))   # raw HBM ref for halo DMA
        inputs.append(x2)
        scratch += [pltpu.VMEM((th + k2 - 1, w2n, cin2), compute_dtype),
                    pltpu.SemaphoreType.DMA((1,))]

    flops1 = int(2 * n * num_t * m_t * (k2 * k2 * cin2) * cout_p)
    bytes1 = int(x2.size * in_bytes + w2.size * in_bytes
                 + n * num_t * m_t * cout_p * in_bytes + n * 2 * cout_p * 4)

    y_conv, stats = pl.pallas_call(
        kern1,
        out_shape=(jax.ShapeDtypeStruct((n, num_t, m_t, cout_p), compute_dtype),
                   jax.ShapeDtypeStruct((n, 2, cout_p), jnp.float32)),
        grid_spec=pltpu.PrefetchScalarGridSpec(
            num_scalar_prefetch=0,
            grid=(n, num_t),
            in_specs=in_specs,
            out_specs=[
                pl.BlockSpec((1, 1, m_t, cout_p), lambda b, t: (b, t, 0, 0)),
                pl.BlockSpec((1, 2, cout_p), lambda b, t: (b, 0, 0)),
            ],
            scratch_shapes=scratch,
        ),
        compiler_params=pltpu.CompilerParams(
            dimension_semantics=("parallel", "arbitrary"),
            vmem_limit_bytes=vmem_limit),
        cost_estimate=pl.CostEstimate(flops=flops1, transcendentals=0,
                                      bytes_accessed=bytes1),
    )(*inputs)

    kern2 = functools.partial(_norm_lrelu_kernel, count=h_out * w_out,
                              th=th, w_out=w_out, cout=cout)
    bytes2 = int(y_conv.size * in_bytes + stats.size * 4
                 + n * num_t * m_t * cout * 4)
    out_rows = pl.pallas_call(
        kern2,
        out_shape=jax.ShapeDtypeStruct((n, num_t * th, w_out, cout), jnp.float32),
        grid_spec=pltpu.PrefetchScalarGridSpec(
            num_scalar_prefetch=0,
            grid=(n, num_t),
            in_specs=[
                pl.BlockSpec((1, 1, m_t, cout_p), lambda b, t: (b, t, 0, 0)),
                pl.BlockSpec((1, 2, cout_p), lambda b, t: (b, 0, 0)),
            ],
            out_specs=pl.BlockSpec((1, th, w_out, cout), lambda b, t: (b, t, 0, 0)),
        ),
        compiler_params=pltpu.CompilerParams(
            dimension_semantics=("parallel", "parallel"),
            vmem_limit_bytes=vmem_limit),
        cost_estimate=pl.CostEstimate(flops=8 * int(y_conv.size),
                                      transcendentals=n * num_t * cout_p,
                                      bytes_accessed=bytes2),
    )(y_conv, stats)

    out_nhwc = out_rows[:, :h_out]          # strip padded rows (already channel-unpadded)
    return jnp.transpose(out_nhwc, (0, 3, 1, 2))


def _reference(x_nchw, weight_oihw, bias, stride):
    """Pure-JAX reference matching the PyTorch ConvBlock (f32, highest precision)."""
    w_hwio = jnp.transpose(weight_oihw, (2, 3, 1, 0))
    x_nhwc = jnp.transpose(x_nchw, (0, 2, 3, 1))
    x_pad = jnp.pad(x_nhwc, ((0, 0), (1, 1), (1, 1), (0, 0)), mode="reflect")
    y = lax.conv_general_dilated(
        x_pad, w_hwio, (stride, stride), "VALID",
        dimension_numbers=("NHWC", "HWIO", "NHWC"),
        precision=lax.Precision.HIGHEST) + bias
    mean = y.mean(axis=(1, 2), keepdims=True)
    var = jnp.square(y - mean).mean(axis=(1, 2), keepdims=True)
    y = (y - mean) * lax.rsqrt(var + EPS)
    y = jnp.where(y > 0, y, NEG_SLOPE * y)
    return jnp.transpose(y, (0, 3, 1, 2))


if __name__ == "__main__":
    # Small shapes consistent with the module: N=2, Cin=4, Cout=8, 16x16.
    batch, in_ch, out_ch, hw = 2, 4, 8, 16

    key = jax.random.PRNGKey(0)
    kx, kw, kb = jax.random.split(key, 3)
    x = jax.random.normal(kx, (batch, in_ch, hw, hw), dtype=jnp.float32)
    weight = jax.random.normal(kw, (out_ch, in_ch, K, K), dtype=jnp.float32) * 0.1
    bias = jax.random.normal(kb, (out_ch,), dtype=jnp.float32) * 0.1

    cases = (
        dict(stride=2, compute_dtype=jnp.bfloat16, tol=3e-2),                     # fused
        dict(stride=2, compute_dtype=jnp.float32, tol=1e-2),                      # fused f32
        dict(stride=1, compute_dtype=jnp.bfloat16, tol=3e-2),                     # fused k2=4
        dict(stride=2, compute_dtype=jnp.bfloat16, tol=5e-2, force_tile_rows=3),  # tiled + halo
        dict(stride=1, compute_dtype=jnp.float32, tol=1e-2, force_tile_rows=4),   # tiled k2=4
    )
    for c in cases:
        tol = c.pop("tol")
        out = jax.block_until_ready(conv_block(x, weight, bias, **c))
        ref = jax.block_until_ready(_reference(x, weight, bias, c["stride"]))
        assert out.shape == ref.shape, (c, out.shape, ref.shape)
        err = float(jnp.max(jnp.abs(out - ref)))
        assert err < tol, (c, err)

    print("KERNEL_OK")
</pallas_src>

<mosaic_0001>
module attributes {stable_mosaic.version = 11 : i64} {
  func.func @_fused_kernel(%arg0: i32, %arg1: memref<1x9x9x16xbf16, #tpu.memory_space<vmem>>, %arg2: memref<2x2x16x128xbf16, #tpu.memory_space<vmem>>, %arg3: memref<1x8x8x8xf32, #tpu.memory_space<vmem>>, %arg4: memref<64x128xf32, #tpu.memory_space<vmem>>) attributes {dimension_semantics = [#tpu.dimension_semantics<parallel>], iteration_bounds = array<i64: 2>, scalar_prefetch = 0 : i64, scratch_operands = 1 : i64, tpu.core_type = #tpu.core_type<tc>, window_params = [{transform_indices = @transform_0, window_bounds = array<i64: 1, 9, 9, 16>}, {pipeline_mode = #tpu.pipeline_mode<synchronous>, transform_indices = @transform_1, window_bounds = array<i64: 2, 2, 16, 128>}, {transform_indices = @transform_2, window_bounds = array<i64: 1, 8, 8, 8>}]} {
    %cst = arith.constant 0.000000e+00 : f32
    %0 = vector.broadcast %cst : f32 to vector<64x128xf32>
    %c0 = arith.constant 0 : index
    %c0_0 = arith.constant 0 : index
    %1 = vector.load %arg4[%c0, %c0_0] : memref<64x128xf32, #tpu.memory_space<vmem>>, vector<64x128xf32>
    tpu.vector_store %arg4[%c0, %c0_0], %0 {strides = array<i32>} : memref<64x128xf32, #tpu.memory_space<vmem>>, vector<64x128xf32>,
    %c0_1 = arith.constant 0 : index
    %c0_2 = arith.constant 0 : index
    %c0_3 = arith.constant 0 : index
    %c0_4 = arith.constant 0 : index
    %2 = vector.load %arg1[%c0_1, %c0_2, %c0_3, %c0_4] : memref<1x9x9x16xbf16, #tpu.memory_space<vmem>>, vector<1x8x8x16xbf16>
    %3 = vector.shape_cast %2 : vector<1x8x8x16xbf16> to vector<8x8x16xbf16>
    %4 = vector.shape_cast %3 : vector<8x8x16xbf16> to vector<64x16xbf16>
    %c0_5 = arith.constant 0 : index
    %c0_6 = arith.constant 0 : index
    %5 = vector.load %arg4[%c0_5, %c0_6] : memref<64x128xf32, #tpu.memory_space<vmem>>, vector<64x128xf32>
    %c0_7 = arith.constant 0 : index
    %c0_8 = arith.constant 0 : index
    %c0_9 = arith.constant 0 : index
    %c0_10 = arith.constant 0 : index
    %6 = vector.load %arg2[%c0_7, %c0_8, %c0_9, %c0_10] : memref<2x2x16x128xbf16, #tpu.memory_space<vmem>>, vector<1x1x16x128xbf16>
    %7 = vector.shape_cast %6 : vector<1x1x16x128xbf16> to vector<16x128xbf16>
    %cst_11 = arith.constant dense<0.000000e+00> : vector<64x128xf32>
    %8 = tpu.matmul %4, %7, %cst_11 {dimension_numbers = #tpu.dot_dimension_numbers<[1], [0], [0], [1], [0, 0, 1, 1], [], []>} : vector<64x16xbf16>, vector<16x128xbf16>, vector<64x128xf32> -> vector<64x128xf32>
    %9 = arith.addf %5, %8 : vector<64x128xf32>
    %c0_12 = arith.constant 0 : index
    %c0_13 = arith.constant 0 : index
    %10 = vector.load %arg4[%c0_12, %c0_13] : memref<64x128xf32, #tpu.memory_space<vmem>>, vector<64x128xf32>
    tpu.vector_store %arg4[%c0_12, %c0_13], %9 {strides = array<i32>} : memref<64x128xf32, #tpu.memory_space<vmem>>, vector<64x128xf32>,
    %c0_14 = arith.constant 0 : index
    %c0_15 = arith.constant 0 : index
    %c1 = arith.constant 1 : index
    %c0_16 = arith.constant 0 : index
    %11 = vector.load %arg1[%c0_14, %c0_15, %c1, %c0_16] : memref<1x9x9x16xbf16, #tpu.memory_space<vmem>>, vector<1x8x8x16xbf16>
    %12 = vector.shape_cast %11 : vector<1x8x8x16xbf16> to vector<8x8x16xbf16>
    %13 = vector.shape_cast %12 : vector<8x8x16xbf16> to vector<64x16xbf16>
    %c0_17 = arith.constant 0 : index
    %c0_18 = arith.constant 0 : index
    %14 = vector.load %arg4[%c0_17, %c0_18] : memref<64x128xf32, #tpu.memory_space<vmem>>, vector<64x128xf32>
    %c0_19 = arith.constant 0 : index
    %c1_20 = arith.constant 1 : index
    %c0_21 = arith.constant 0 : index
    %c0_22 = arith.constant 0 : index
    %15 = vector.load %arg2[%c0_19, %c1_20, %c0_21, %c0_22] : memref<2x2x16x128xbf16, #tpu.memory_space<vmem>>, vector<1x1x16x128xbf16>
    %16 = vector.shape_cast %15 : vector<1x1x16x128xbf16> to vector<16x128xbf16>
    %cst_23 = arith.constant dense<0.000000e+00> : vector<64x128xf32>
    %17 = tpu.matmul %13, %16, %cst_23 {dimension_numbers = #tpu.dot_dimension_numbers<[1], [0], [0], [1], [0, 0, 1, 1], [], []>} : vector<64x16xbf16>, vector<16x128xbf16>, vector<64x128xf32> -> vector<64x128xf32>
    %18 = arith.addf %14, %17 : vector<64x128xf32>
    %c0_24 = arith.constant 0 : index
    %c0_25 = arith.constant 0 : index
    %19 = vector.load %arg4[%c0_24, %c0_25] : memref<64x128xf32, #tpu.memory_space<vmem>>, vector<64x128xf32>
    tpu.vector_store %arg4[%c0_24, %c0_25], %18 {strides = array<i32>} : memref<64x128xf32, #tpu.memory_space<vmem>>, vector<64x128xf32>,
    %c0_26 = arith.constant 0 : index
    %c1_27 = arith.constant 1 : index
    %c0_28 = arith.constant 0 : index
    %c0_29 = arith.constant 0 : index
    %20 = vector.load %arg1[%c0_26, %c1_27, %c0_28, %c0_29] : memref<1x9x9x16xbf16, #tpu.memory_space<vmem>>, vector<1x8x8x16xbf16>
    %21 = vector.shape_cast %20 : vector<1x8x8x16xbf16> to vector<8x8x16xbf16>
    %22 = vector.shape_cast %21 : vector<8x8x16xbf16> to vector<64x16xbf16>
    %c0_30 = arith.constant 0 : index
    %c0_31 = arith.constant 0 : index
    %23 = vector.load %arg4[%c0_30, %c0_31] : memref<64x128xf32, #tpu.memory_space<vmem>>, vector<64x128xf32>
    %c1_32 = arith.constant 1 : index
    %c0_33 = arith.constant 0 : index
    %c0_34 = arith.constant 0 : index
    %c0_35 = arith.constant 0 : index
    %24 = vector.load %arg2[%c1_32, %c0_33, %c0_34, %c0_35] : memref<2x2x16x128xbf16, #tpu.memory_space<vmem>>, vector<1x1x16x128xbf16>
    %25 = vector.shape_cast %24 : vector<1x1x16x128xbf16> to vector<16x128xbf16>
    %cst_36 = arith.constant dense<0.000000e+00> : vector<64x128xf32>
    %26 = tpu.matmul %22, %25, %cst_36 {dimension_numbers = #tpu.dot_dimension_numbers<[1], [0], [0], [1], [0, 0, 1, 1], [], []>} : vector<64x16xbf16>, vector<16x128xbf16>, vector<64x128xf32> -> vector<64x128xf32>
    %27 = arith.addf %23, %26 : vector<64x128xf32>
    %c0_37 = arith.constant 0 : index
    %c0_38 = arith.constant 0 : index
    %28 = vector.load %arg4[%c0_37, %c0_38] : memref<64x128xf32, #tpu.memory_space<vmem>>, vector<64x128xf32>
    tpu.vector_store %arg4[%c0_37, %c0_38], %27 {strides = array<i32>} : memref<64x128xf32, #tpu.memory_space<vmem>>, vector<64x128xf32>,
    %c0_39 = arith.constant 0 : index
    %c1_40 = arith.constant 1 : index
    %c1_41 = arith.constant 1 : index
    %c0_42 = arith.constant 0 : index
    %29 = vector.load %arg1[%c0_39, %c1_40, %c1_41, %c0_42] : memref<1x9x9x16xbf16, #tpu.memory_space<vmem>>, vector<1x8x8x16xbf16>
    %30 = vector.shape_cast %29 : vector<1x8x8x16xbf16> to vector<8x8x16xbf16>
    %31 = vector.shape_cast %30 : vector<8x8x16xbf16> to vector<64x16xbf16>
    %c0_43 = arith.constant 0 : index
    %c0_44 = arith.constant 0 : index
    %32 = vector.load %arg4[%c0_43, %c0_44] : memref<64x128xf32, #tpu.memory_space<vmem>>, vector<64x128xf32>
    %c1_45 = arith.constant 1 : index
    %c1_46 = arith.constant 1 : index
    %c0_47 = arith.constant 0 : index
    %c0_48 = arith.constant 0 : index
    %33 = vector.load %arg2[%c1_45, %c1_46, %c0_47, %c0_48] : memref<2x2x16x128xbf16, #tpu.memory_space<vmem>>, vector<1x1x16x128xbf16>
    %34 = vector.shape_cast %33 : vector<1x1x16x128xbf16> to vector<16x128xbf16>
    %cst_49 = arith.constant dense<0.000000e+00> : vector<64x128xf32>
    %35 = tpu.matmul %31, %34, %cst_49 {dimension_numbers = #tpu.dot_dimension_numbers<[1], [0], [0], [1], [0, 0, 1, 1], [], []>} : vector<64x16xbf16>, vector<16x128xbf16>, vector<64x128xf32> -> vector<64x128xf32>
    %36 = arith.addf %32, %35 : vector<64x128xf32>
    %c0_50 = arith.constant 0 : index
    %c0_51 = arith.constant 0 : index
    %37 = vector.load %arg4[%c0_50, %c0_51] : memref<64x128xf32, #tpu.memory_space<vmem>>, vector<64x128xf32>
    tpu.vector_store %arg4[%c0_50, %c0_51], %36 {strides = array<i32>} : memref<64x128xf32, #tpu.memory_space<vmem>>, vector<64x128xf32>,
    %c0_52 = arith.constant 0 : index
    %c0_53 = arith.constant 0 : index
    %38 = vector.load %arg4[%c0_52, %c0_53] : memref<64x128xf32, #tpu.memory_space<vmem>>, vector<64x128xf32>
    %cst_54 = arith.constant dense<0.000000e+00> : vector<128xf32>
    %39 = vector.multi_reduction <add>, %38, %cst_54 [0] : vector<64x128xf32> to vector<128xf32>
    %40 = vector.shape_cast %39 : vector<128xf32> to vector<1x128xf32>
    %cst_55 = arith.constant 1.562500e-02 : f32
    %41 = vector.broadcast %cst_55 : f32 to vector<1x128xf32>
    %42 = arith.mulf %40, %41 : vector<1x128xf32>
    %43 = vector.broadcast %42 : vector<1x128xf32> to vector<64x128xf32>
    %44 = arith.subf %38, %43 : vector<64x128xf32>
    %45 = arith.mulf %44, %44 : vector<64x128xf32>
    %cst_56 = arith.constant dense<0.000000e+00> : vector<128xf32>
    %46 = vector.multi_reduction <add>, %45, %cst_56 [0] : vector<64x128xf32> to vector<128xf32>
    %47 = vector.shape_cast %46 : vector<128xf32> to vector<1x128xf32>
    %cst_57 = arith.constant 1.562500e-02 : f32
    %48 = vector.broadcast %cst_57 : f32 to vector<1x128xf32>
    %49 = arith.mulf %47, %48 : vector<1x128xf32>
    %cst_58 = arith.constant 9.99999974E-6 : f32
    %50 = vector.broadcast %cst_58 : f32 to vector<1x128xf32>
    %51 = arith.addf %49, %50 : vector<1x128xf32>
    %52 = math.rsqrt %51 : vector<1x128xf32>
    %53 = vector.broadcast %52 : vector<1x128xf32> to vector<64x128xf32>
    %54 = arith.mulf %44, %53 : vector<64x128xf32>
    %cst_59 = arith.constant 0.000000e+00 : f32
    %55 = vector.broadcast %cst_59 : f32 to vector<64x128xf32>
    %56 = arith.cmpf ogt, %54, %55 : vector<64x128xf32>
    %cst_60 = arith.constant 2.000000e-01 : f32
    %57 = vector.broadcast %cst_60 : f32 to vector<64x128xf32>
    %58 = arith.mulf %57, %54 : vector<64x128xf32>
    %59 = arith.select %56, %54, %58 : vector<64x128xi1>, vector<64x128xf32>
    %60 = vector.extract_strided_slice %59 {offsets = [0, 0], sizes = [64, 8], strides = [1, 1]} : vector<64x128xf32> to vector<64x8xf32>
    %61 = vector.shape_cast %60 : vector<64x8xf32> to vector<8x8x8xf32>
    %c0_61 = arith.constant 0 : index
    %c0_62 = arith.constant 0 : index
    %c0_63 = arith.constant 0 : index
    %c0_64 = arith.constant 0 : index
    %62 = vector.load %arg3[%c0_61, %c0_62, %c0_63, %c0_64] : memref<1x8x8x8xf32, #tpu.memory_space<vmem>>, vector<1x8x8x8xf32>
    %63 = vector.shape_cast %62 : vector<1x8x8x8xf32> to vector<8x8x8xf32>
    %64 = vector.shape_cast %61 : vector<8x8x8xf32> to vector<1x8x8x8xf32>
    tpu.vector_store %arg3[%c0_61, %c0_62, %c0_63, %c0_64], %64 {strides = array<i32>} : memref<1x8x8x8xf32, #tpu.memory_space<vmem>>, vector<1x8x8x8xf32>,
    return
  }
  func.func @transform_0(%arg0: i32) -> (i32, i32, i32, i32) {
    %c0_i32 = arith.constant 0 : i32
    %c0_i32_0 = arith.constant 0 : i32
    %c0_i32_1 = arith.constant 0 : i32
    %c0_i32_2 = arith.constant 0 : i32
    return %arg0, %c0_i32, %c0_i32_0, %c0_i32_1 : i32, i32, i32, i32
  }
  func.func @transform_1(%arg0: i32) -> (i32, i32, i32, i32) {
    %c0_i32 = arith.constant 0 : i32
    %c0_i32_0 = arith.constant 0 : i32
    %c0_i32_1 = arith.constant 0 : i32
    %c0_i32_2 = arith.constant 0 : i32
    %c0_i32_3 = arith.constant 0 : i32
    return %c0_i32, %c0_i32_0, %c0_i32_1, %c0_i32_2 : i32, i32, i32, i32
  }
  func.func @transform_2(%arg0: i32) -> (i32, i32, i32, i32) {
    %c0_i32 = arith.constant 0 : i32
    %c0_i32_0 = arith.constant 0 : i32
    %c0_i32_1 = arith.constant 0 : i32
    %c0_i32_2 = arith.constant 0 : i32
    return %arg0, %c0_i32, %c0_i32_0, %c0_i32_1 : i32, i32, i32, i32
  }
}

</mosaic_0001>

<llo_original>
// kernel: conv_block.1
$region0: #{conv_block.1}
  #allocation0 [shape = 'u32[]', space=smem, size = 0x4, offset = 0x4, fixed_abs, tag = 'smem constant byte address 0x4 - core index']
  #allocation1 [shape = 'u32[144,128]{1,0:T(1,128)}', space=vmem, size = 0x12000, scoped, tag = 'internal scratch']
  #allocation2 [shape = 'f32[64,128]{1,0:T(8,128)}', space=vmem, size = 0x8000, scoped, tag = 'scratch operand']
  %s0 = inlined_call_operand.vmem [shape: bf16[2,9,9,16], index: 0, kind: input, shape index: {}]
  %s1 = inlined_call_operand.vmem [shape: bf16[2,2,16,128], index: 1, kind: input, shape index: {}]
  %s2 = inlined_call_operand.vmem [shape: f32[2,8,8,8], index: 2, kind: output, shape index: {}]
  %s3 = sld [smem:[#allocation0]]
  $region41: #{conv_block.1} parent=0
    _
  %s5 = ssub.s32 1, %s3
  %s6 = scalar_select 0, %s5, %s3
  loop: start=0, step=1, limit=4
  $region2: #{conv_block.1} parent=0 // loop_pre_header
    _
  $region3: #{conv_block.1} parent=0 // loop_header
    %s8 = sphi 0, %s12
    %p9 = scmp.ge.s32.totalorder %s8, 4
    %s18 = sphi 0, %s20
    %s21 = sphi 0, %s18
    %s22 = sphi 0, %s21
    %s38 = sphi 0, %s22
    %s42 = sphi 0, %s42
    %s44 = sphi 0, %s42
    %s45 = sphi 0, %s44
    %s59 = sphi 0, %s45
    %s65 = sphi 0, %s67
    %s68 = sphi 0, %s65
    %s69 = sphi 0, %s68
    %s85 = sphi 0, %s69
  $region4: #{conv_block.1} parent=0 // loop_header_branch
    %11 = sbr.rel (%p9) target = $region8
  $region5: #{conv_block.1} parent=0 // loop_body
    %s13 = ssub.s32 %s8, 1
    %s14 = ssub.s32 %s8, 2
    %s15 = sadd.s32 %s8, 1
    %s16 = ssub.s32 %s8, %s15
    %p17 = scmp.eq.s32.totalorder %s16, 0
    %s19 = sadd.s32 %s18, 1
    %s20 = scalar_select %p17, %s18, %s19
    %p23 = pneg %p17
    %p24 = scmp.eq.s32.totalorder %s8, 1
    %p25 = por %p23, %p24
    %p26 = scmp.ne.s32.totalorder %s18, %s21
    %p27 = scmp.eq.s32.totalorder %s8, 0
    %p28 = por %p26, %p27
    %p29 = scmp.ne.s32.totalorder %s18, %s21
    %p30 = scmp.eq.s32.totalorder %s13, 1
    %p31 = por %p29, %p30
    %p32 = scmp.ne.s32.totalorder %s21, %s22
    %p33 = scmp.eq.s32.totalorder %s13, 0
    %p34 = por %p32, %p33
    %p35 = scmp.ne.s32.totalorder %s21, %s22
    %p36 = scmp.eq.s32.totalorder %s14, 1
    %p37 = por %p35, %p36
    %p39 = scmp.ne.s32.totalorder %s22, %s38
    %p40 = scmp.eq.s32.totalorder %s14, 0
    %p41 = por %p39, %p40
    %s43 = sadd.s32 %s42, 1
    %p46 = scmp.eq.s32.totalorder %s8, 1
    %p47 = scmp.ne.s32.totalorder %s42, %s44
    %p48 = scmp.eq.s32.totalorder %s8, 0
    %p49 = por %p47, %p48
    %p50 = scmp.ne.s32.totalorder %s42, %s44
    %p51 = scmp.eq.s32.totalorder %s13, 1
    %p52 = por %p50, %p51
    %p53 = scmp.ne.s32.totalorder %s44, %s45
    %p54 = scmp.eq.s32.totalorder %s13, 0
    %p55 = por %p53, %p54
    %p56 = scmp.ne.s32.totalorder %s44, %s45
    %p57 = scmp.eq.s32.totalorder %s14, 1
    %p58 = por %p56, %p57
    %p60 = scmp.ne.s32.totalorder %s45, %s59
    %p61 = scmp.eq.s32.totalorder %s14, 0
    %p62 = por %p60, %p61
    %s63 = ssub.s32 %s8, %s15
    %p64 = scmp.eq.s32.totalorder %s63, 0
    %s66 = sadd.s32 %s65, 1
    %s67 = scalar_select %p64, %s65, %s66
    %p70 = pneg %p64
    %p71 = scmp.eq.s32.totalorder %s8, 1
    %p72 = por %p70, %p71
    %p73 = scmp.ne.s32.totalorder %s65, %s68
    %p74 = scmp.eq.s32.totalorder %s8, 0
    %p75 = por %p73, %p74
    %p76 = scmp.ne.s32.totalorder %s65, %s68
    %p77 = scmp.eq.s32.totalorder %s13, 1
    %p78 = por %p76, %p77
    %p79 = scmp.ne.s32.totalorder %s68, %s69
    %p80 = scmp.eq.s32.totalorder %s13, 0
    %p81 = por %p79, %p80
    %p82 = scmp.ne.s32.totalorder %s68, %s69
    %p83 = scmp.eq.s32.totalorder %s14, 1
    %p84 = por %p82, %p83
    %p86 = scmp.ne.s32.totalorder %s69, %s85
    %p87 = scmp.eq.s32.totalorder %s14, 0
    %p88 = por %p86, %p87
    %p89 = scmp.le.s32.totalorder 1, %s8
    %p90 = scmp.lt.s32.totalorder %s8, 3
    %p91 = pnand %p89, %p90
    %p92 = pneg %p91
    // Predicated region
    $region9: #{conv_block.1} parent=5 // pred_check
      _
    $region10: #{conv_block.1} parent=5 // pred_check_branch
      %94 = sbr.rel (%p91) target = $region12
    $region11: #{conv_block.1} parent=5 // pred_region
      %s95 = ssub.s32 %s8, 1
      // Predicated region
      $region13: #{conv_block.1} parent=11 // pred_check
        %p96 = pneg %p55
      $region14: #{conv_block.1} parent=11 // pred_check_branch
        %98 = sbr.rel (%p96) target = $region16
      $region15: #{conv_block.1} parent=11 // pred_region
        _
      $region16: #{conv_block.1} parent=11 // pred_fallthru
        _
    $region12: #{conv_block.1} parent=5 // pred_fallthru
      _
    %p99 = scmp.lt.s32.totalorder %s8, 2
    // Predicated region
    $region17: #{conv_block.1} parent=5 // pred_check
      %p100 = pneg %p99
    $region18: #{conv_block.1} parent=5 // pred_check_branch
      %102 = sbr.rel (%p100) target = $region20
    $region19: #{conv_block.1} parent=5 // pred_region
      // Predicated region
      $region21: #{conv_block.1} parent=19 // pred_check
        %p103 = pneg %p28
      $region22: #{conv_block.1} parent=19 // pred_check_branch
        %105 = sbr.rel (%p103) target = $region24
      $region23: #{conv_block.1} parent=19 // pred_region
        %p106 = scmp.lt.s32.totalorder %s8, 1
        %s107 = scalar_select %p106, %s8, 1
        %s108 = smul.addr %s107, 18
        %s109 = smul.addr %s108, 4
        %s110 = scalar_lea.vmem %s0, %s109
      $region24: #{conv_block.1} parent=19 // pred_fallthru
        _
    $region20: #{conv_block.1} parent=5 // pred_fallthru
      _
    %p111 = scmp.le.s32.totalorder 1, %s8
    %p112 = scmp.lt.s32.totalorder %s8, 3
    %p113 = pnand %p111, %p112
    %p114 = pneg %p113
    // Predicated region
    $region25: #{conv_block.1} parent=5 // pred_check
      _
    $region26: #{conv_block.1} parent=5 // pred_check_branch
      %116 = sbr.rel (%p113) target = $region28
    $region27: #{conv_block.1} parent=5 // pred_region
      %s117 = ssub.s32 %s8, 1
      %p118 = scmp.lt.s32.totalorder %s13, 1
      %s119 = scalar_select %p118, %s13, 1
      %s120 = smul.addr %s119, 18
      %s121 = smul.addr %s120, 4
      %s122 = scalar_lea.vmem %s0, %s121
      %p123 = pneg %p34
      %p124 = pneg %p31
      %p125 = pneg %p55
      %p126 = pneg %p52
      %p127 = pneg %p81
      %p128 = pneg %p78
      %p129 = scmp.lt.s32.totalorder %s13, 1
      %s130 = scalar_select %p129, %s13, 1
      %s131 = smul.addr %s130, 8
      %s132 = smul.addr %s131, 8
      %s133 = scalar_lea.vmem %s2, %s132
      %p134 = scmp.lt.s32.totalorder %s13, 1
      %s135 = scalar_select %p134, %s13, 1
      %s136 = smul.addr %s135, 18
      %s137 = smul.addr %s136, 4
      %s138 = scalar_lea.vmem %s0, %s137
      %p139 = scmp.lt.s32.totalorder %s13, 1
      %s140 = scalar_select %p139, %s13, 1
      %s141 = smul.addr %s140, 8
      %s142 = smul.addr %s141, 8
      %s143 = scalar_lea.vmem %s2, %s142
      %145 = vst [vmem:[#allocation2] sm:$0xff] 0.0
      %146 = vst [vmem:[#allocation2 + $0x8] sm:$0xff] 0.0
      %147 = vst [vmem:[#allocation2 + $0x10] sm:$0xff] 0.0
      %148 = vst [vmem:[#allocation2 + $0x18] sm:$0xff] 0.0
      %149 = vst [vmem:[#allocation2 + $0x20] sm:$0xff] 0.0
      %150 = vst [vmem:[#allocation2 + $0x28] sm:$0xff] 0.0
      %151 = vst [vmem:[#allocation2 + $0x30] sm:$0xff] 0.0
      %152 = vst [vmem:[#allocation2 + $0x38] sm:$0xff] 0.0
      %v153 = vld [vmem:[%s138] sm:$0xf]
      %v154 = vld [vmem:[%s138 + $0x8] sm:$0xf]
      %v155 = vld [vmem:[%s138 + $0x10] sm:$0xf]
      %v156 = vld [vmem:[%s138 + $0x18] sm:$0xf]
      %v157 = vld [vmem:[%s138 + $0x20] sm:$0xf]
      %v158 = vld [vmem:[%s138 + $0x28] sm:$0xf]
      %v159 = vld [vmem:[%s138 + $0x30] sm:$0xf]
      %v160 = vld [vmem:[%s138 + $0x38] sm:$0xf]
      %v161 = vld [vmem:[#allocation2] sm:$0xff]
      %v162 = vld [vmem:[#allocation2 + $0x8] sm:$0xff]
      %v163 = vld [vmem:[#allocation2 + $0x10] sm:$0xff]
      %v164 = vld [vmem:[#allocation2 + $0x18] sm:$0xff]
      %v165 = vld [vmem:[#allocation2 + $0x20] sm:$0xff]
      %v166 = vld [vmem:[#allocation2 + $0x28] sm:$0xff]
      %v167 = vld [vmem:[#allocation2 + $0x30] sm:$0xff]
      %v168 = vld [vmem:[#allocation2 + $0x38] sm:$0xff]
      %v169 = vld [vmem:[%s1] sm:$0xf]
      %v170 = vld [vmem:[%s1 + $0x4] sm:$0xf]
      %v179 = vunpack.c.l.b16 %v153
      %v180 = vunpack.c.l.b16 %v154
      %v181 = vunpack.c.l.b16 %v155
      %v182 = vunpack.c.l.b16 %v156
      %v183 = vunpack.c.l.b16 %v157
      %v184 = vunpack.c.l.b16 %v158
      %v185 = vunpack.c.l.b16 %v159
      %v186 = vunpack.c.l.b16 %v160
      %v187 = vpack.c.b16 %v180, %v179
      %v188 = vpack.c.b16 %v182, %v181
      %v189 = vpack.c.b16 %v184, %v183
      %v190 = vpack.c.b16 %v186, %v185
      %v193 = vunpack.c.l.b16 %v169
      %v194 = vunpack.c.l.b16 %v170
      %v195 = vpack.c.b16 %v194, %v193
      %vm197 = vcmask 130048
      %v199 = vsel %vm197, %v187, 0
      %v202 = vsel %vm197, %v188, 0
      %v205 = vsel %vm197, %v189, 0
      %v208 = vsel %vm197, %v190, 0
      %210 = vmatprep.subr.bf16.mxu0 0
      %211 = vmatpush1.bf16.msra.mxu0 %v195
      %212 = vmatprep.subr.bf16.mxu0 0
      %213 = vmatpush1.bf16.msra.mxu0 0
      %214 = vmatprep.subr.bf16.mxu0 0
      %215 = vmatpush1.bf16.msra.mxu0 0
      %216 = vmatprep.subr.bf16.mxu0 0
      %217 = vmatpush1.bf16.msra.mxu0 0
      %218 = vmatprep.subr.bf16.mxu0 0
      %219 = vmatpush1.bf16.msra.mxu0 0
      %220 = vmatprep.subr.bf16.mxu0 0
      %221 = vmatpush1.bf16.msra.mxu0 0
      %222 = vmatprep.subr.bf16.mxu0 0
      %223 = vmatpush1.bf16.msra.mxu0 0
      %224 = vmatprep.subr.bf16.mxu0 0
      %225 = vmatpush1.bf16.msra.mxu0 0
      %226 = vmatprep.subr.bf16.mxu0 0
      %227 = vmatpush1.bf16.msra.mxu0 0
      %228 = vmatprep.subr.bf16.mxu0 0
      %229 = vmatpush1.bf16.msra.mxu0 0
      %230 = vmatprep.subr.bf16.mxu0 0
      %231 = vmatpush1.bf16.msra.mxu0 0
      %232 = vmatprep.subr.bf16.mxu0 0
      %233 = vmatpush1.bf16.msra.mxu0 0
      %234 = vmatprep.subr.bf16.mxu0 0
      %235 = vmatpush1.bf16.msra.mxu0 0
      %236 = vmatprep.subr.bf16.mxu0 0
      %237 = vmatpush1.bf16.msra.mxu0 0
      %238 = vmatprep.subr.bf16.mxu0 0
      %239 = vmatpush1.bf16.msra.mxu0 0
      %240 = vmatprep.subr.bf16.mxu0 0
      %241 = vmatpush1.bf16.msra.mxu0 0
      %242 = vmatprep.mubr.bf16.mxu0 0
      %243 = vmatmul.mubr.bf16.gmra.mrb[0].mxu0 %v199
      %v244 = vpop.f32.mrb[0].mxu0
      %v245 = vadd.f32 0.0, %v244
      %v246 = vpop.f32.mrb[0].mxu0
      %v247 = vpop.f32.mrb[0].mxu0
      %v248 = vadd.f32 0.0, %v247
      %v249 = vpop.f32.mrb[0].mxu0
      %250 = vmatprep.mubr.bf16.mxu0 0
      %251 = vmatmul.mubr.bf16.gmra.mrb[0].mxu0 %v202
      %v252 = vpop.f32.mrb[0].mxu0
      %v253 = vadd.f32 0.0, %v252
      %v254 = vpop.f32.mrb[0].mxu0
      %v255 = vpop.f32.mrb[0].mxu0
      %v256 = vadd.f32 0.0, %v255
      %v257 = vpop.f32.mrb[0].mxu0
      %258 = vmatprep.mubr.bf16.mxu0 0
      %259 = vmatmul.mubr.bf16.gmra.mrb[0].mxu0 %v205
      %v260 = vpop.f32.mrb[0].mxu0
      %v261 = vadd.f32 0.0, %v260
      %v262 = vpop.f32.mrb[0].mxu0
      %v263 = vpop.f32.mrb[0].mxu0
      %v264 = vadd.f32 0.0, %v263
      %v265 = vpop.f32.mrb[0].mxu0
      %266 = vmatprep.mubr.bf16.mxu0 0
      %267 = vmatmul.mubr.bf16.gmra.mrb[0].mxu0 %v208
      %v268 = vpop.f32.mrb[0].mxu0
      %v269 = vadd.f32 0.0, %v268
      %v270 = vpop.f32.mrb[0].mxu0
      %v271 = vpop.f32.mrb[0].mxu0
      %v272 = vadd.f32 0.0, %v271
      %v273 = vpop.f32.mrb[0].mxu0
      %274 = vdwg.mxu0
      %v275 = vadd.f32 %v161, %v245
      %v276 = vadd.f32 %v162, %v248
      %v277 = vadd.f32 %v163, %v253
      %v278 = vadd.f32 %v164, %v256
      %v279 = vadd.f32 %v165, %v261
      %v280 = vadd.f32 %v166, %v264
      %v281 = vadd.f32 %v167, %v269
      %v282 = vadd.f32 %v168, %v272
      %283 = vst [vmem:[#allocation2] sm:$0xff] %v275
      %284 = vst [vmem:[#allocation2 + $0x8] sm:$0xff] %v276
      %285 = vst [vmem:[#allocation2 + $0x10] sm:$0xff] %v277
      %286 = vst [vmem:[#allocation2 + $0x18] sm:$0xff] %v278
      %287 = vst [vmem:[#allocation2 + $0x20] sm:$0xff] %v279
      %288 = vst [vmem:[#allocation2 + $0x28] sm:$0xff] %v280
      %289 = vst [vmem:[#allocation2 + $0x30] sm:$0xff] %v281
      %290 = vst [vmem:[#allocation2 + $0x38] sm:$0xff] %v282
      %v291 = vld [vmem:[%s138] sm:$0xf]
      %v292 = vld [vmem:[%s138 + $0x4] sm:$0x1]
      %v293 = vld [vmem:[%s138 + $0x8] sm:$0xf]
      %v294 = vld [vmem:[%s138 + $0xc] sm:$0x1]
      %v295 = vld [vmem:[%s138 + $0x10] sm:$0xf]
      %v296 = vld [vmem:[%s138 + $0x14] sm:$0x1]
      %v297 = vld [vmem:[%s138 + $0x18] sm:$0xf]
      %v298 = vld [vmem:[%s138 + $0x1c] sm:$0x1]
      %v299 = vld [vmem:[%s138 + $0x20] sm:$0xf]
      %v300 = vld [vmem:[%s138 + $0x24] sm:$0x1]
      %v301 = vld [vmem:[%s138 + $0x28] sm:$0xf]
      %v302 = vld [vmem:[%s138 + $0x2c] sm:$0x1]
      %v303 = vld [vmem:[%s138 + $0x30] sm:$0xf]
      %v304 = vld [vmem:[%s138 + $0x34] sm:$0x1]
      %v305 = vld [vmem:[%s138 + $0x38] sm:$0xf]
      %v306 = vld [vmem:[%s138 + $0x3c] sm:$0x1]
      %vm307 = vsmask.f32 3328
      %vm308 = vsmask.f32 7440
      %vm309 = vmor %vm307, %vm308
      %v311 = vshrl.u32 %v291, 16
      %v313 = vrot.slane %v311, 4
      %v314 = vshll.u32 %v291, 16
      %v316 = vrot.slane %v314, 5
      %v317 = vor.u32 %v313, %v316
      %v318 = vrot.slane %v317, 4
      %v320 = vshll.u32 %v292, 16
      %v322 = vrot.slane %v320, 5
      %v323 = vsel %vm309, %v318, %v322
      %v325 = vshrl.u32 %v293, 16
      %v327 = vrot.slane %v325, 4
      %v328 = vshll.u32 %v293, 16
      %v330 = vrot.slane %v328, 5
      %v331 = vor.u32 %v327, %v330
      %v332 = vrot.slane %v331, 4
      %v334 = vshll.u32 %v294, 16
      %v336 = vrot.slane %v334, 5
      %v337 = vsel %vm309, %v332, %v336
      %v339 = vshrl.u32 %v295, 16
      %v341 = vrot.slane %v339, 4
      %v342 = vshll.u32 %v295, 16
      %v344 = vrot.slane %v342, 5
      %v345 = vor.u32 %v341, %v344
      %v346 = vrot.slane %v345, 4
      %v348 = vshll.u32 %v296, 16
      %v350 = vrot.slane %v348, 5
      %v351 = vsel %vm309, %v346, %v350
      %v353 = vshrl.u32 %v297, 16
      %v355 = vrot.slane %v353, 4
      %v356 = vshll.u32 %v297, 16
      %v358 = vrot.slane %v356, 5
      %v359 = vor.u32 %v355, %v358
      %v360 = vrot.slane %v359, 4
      %v362 = vshll.u32 %v298, 16
      %v364 = vrot.slane %v362, 5
      %v365 = vsel %vm309, %v360, %v364
      %v367 = vshrl.u32 %v299, 16
      %v369 = vrot.slane %v367, 4
      %v370 = vshll.u32 %v299, 16
      %v372 = vrot.slane %v370, 5
      %v373 = vor.u32 %v369, %v372
      %v374 = vrot.slane %v373, 4
      %v376 = vshll.u32 %v300, 16
      %v378 = vrot.slane %v376, 5
      %v379 = vsel %vm309, %v374, %v378
      %v381 = vshrl.u32 %v301, 16
      %v383 = vrot.slane %v381, 4
      %v384 = vshll.u32 %v301, 16
      %v386 = vrot.slane %v384, 5
      %v387 = vor.u32 %v383, %v386
      %v388 = vrot.slane %v387, 4
      %v390 = vshll.u32 %v302, 16
      %v392 = vrot.slane %v390, 5
      %v393 = vsel %vm309, %v388, %v392
      %v395 = vshrl.u32 %v303, 16
      %v397 = vrot.slane %v395, 4
      %v398 = vshll.u32 %v303, 16
      %v400 = vrot.slane %v398, 5
      %v401 = vor.u32 %v397, %v400
      %v402 = vrot.slane %v401, 4
      %v404 = vshll.u32 %v304, 16
      %v406 = vrot.slane %v404, 5
      %v407 = vsel %vm309, %v402, %v406
      %v409 = vshrl.u32 %v305, 16
      %v411 = vrot.slane %v409, 4
      %v412 = vshll.u32 %v305, 16
      %v414 = vrot.slane %v412, 5
      %v415 = vor.u32 %v411, %v414
      %v416 = vrot.slane %v415, 4
      %v418 = vshll.u32 %v306, 16
      %v420 = vrot.slane %v418, 5
      %v421 = vsel %vm309, %v416, %v420
      %v422 = vld [vmem:[#allocation2] sm:$0xff]
      %v423 = vld [vmem:[#allocation2 + $0x8] sm:$0xff]
      %v424 = vld [vmem:[#allocation2 + $0x10] sm:$0xff]
      %v425 = vld [vmem:[#allocation2 + $0x18] sm:$0xff]
      %v426 = vld [vmem:[#allocation2 + $0x20] sm:$0xff]
      %v427 = vld [vmem:[#allocation2 + $0x28] sm:$0xff]
      %v428 = vld [vmem:[#allocation2 + $0x30] sm:$0xff]
      %v429 = vld [vmem:[#allocation2 + $0x38] sm:$0xff]
      %s430 = scalar_lea.vmem %s1, 8
      %v431 = vld [vmem:[%s430] sm:$0xf]
      %v432 = vld [vmem:[%s430 + $0x4] sm:$0xf]
      %v433 = vunpack.c.l.b16 %v323
      %v434 = vunpack.c.l.b16 %v337
      %v435 = vunpack.c.l.b16 %v351
      %v436 = vunpack.c.l.b16 %v365
      %v437 = vunpack.c.l.b16 %v379
      %v438 = vunpack.c.l.b16 %v393
      %v439 = vunpack.c.l.b16 %v407
      %v440 = vunpack.c.l.b16 %v421
      %v441 = vpack.c.b16 %v434, %v433
      %v442 = vpack.c.b16 %v436, %v435
      %v443 = vpack.c.b16 %v438, %v437
      %v444 = vpack.c.b16 %v440, %v439
      %v447 = vunpack.c.l.b16 %v431
      %v448 = vunpack.c.l.b16 %v432
      %v449 = vpack.c.b16 %v448, %v447
      %v452 = vsel %vm197, %v441, 0
      %v455 = vsel %vm197, %v442, 0
      %v458 = vsel %vm197, %v443, 0
      %v461 = vsel %vm197, %v444, 0
      %463 = vmatprep.subr.bf16.mxu0 0
      %464 = vmatpush1.bf16.msra.mxu0 %v449
      %465 = vmatprep.subr.bf16.mxu0 0
      %466 = vmatpush1.bf16.msra.mxu0 0
      %467 = vmatprep.subr.bf16.mxu0 0
      %468 = vmatpush1.bf16.msra.mxu0 0
      %469 = vmatprep.subr.bf16.mxu0 0
      %470 = vmatpush1.bf16.msra.mxu0 0
      %471 = vmatprep.subr.bf16.mxu0 0
      %472 = vmatpush1.bf16.msra.mxu0 0
      %473 = vmatprep.subr.bf16.mxu0 0
      %474 = vmatpush1.bf16.msra.mxu0 0
      %475 = vmatprep.subr.bf16.mxu0 0
      %476 = vmatpush1.bf16.msra.mxu0 0
      %477 = vmatprep.subr.bf16.mxu0 0
      %478 = vmatpush1.bf16.msra.mxu0 0
      %479 = vmatprep.subr.bf16.mxu0 0
      %480 = vmatpush1.bf16.msra.mxu0 0
      %481 = vmatprep.subr.bf16.mxu0 0
      %482 = vmatpush1.bf16.msra.mxu0 0
      %483 = vmatprep.subr.bf16.mxu0 0
      %484 = vmatpush1.bf16.msra.mxu0 0
      %485 = vmatprep.subr.bf16.mxu0 0
      %486 = vmatpush1.bf16.msra.mxu0 0
      %487 = vmatprep.subr.bf16.mxu0 0
      %488 = vmatpush1.bf16.msra.mxu0 0
      %489 = vmatprep.subr.bf16.mxu0 0
      %490 = vmatpush1.bf16.msra.mxu0 0
      %491 = vmatprep.subr.bf16.mxu0 0
      %492 = vmatpush1.bf16.msra.mxu0 0
      %493 = vmatprep.subr.bf16.mxu0 0
      %494 = vmatpush1.bf16.msra.mxu0 0
      %495 = vmatprep.mubr.bf16.mxu0 0
      %496 = vmatmul.mubr.bf16.gmra.mrb[0].mxu0 %v452
      %v497 = vpop.f32.mrb[0].mxu0
      %v498 = vadd.f32 0.0, %v497
      %v499 = vpop.f32.mrb[0].mxu0
      %v500 = vpop.f32.mrb[0].mxu0
      %v501 = vadd.f32 0.0, %v500
      %v502 = vpop.f32.mrb[0].mxu0
      %503 = vmatprep.mubr.bf16.mxu0 0
      %504 = vmatmul.mubr.bf16.gmra.mrb[0].mxu0 %v455
      %v505 = vpop.f32.mrb[0].mxu0
      %v506 = vadd.f32 0.0, %v505
      %v507 = vpop.f32.mrb[0].mxu0
      %v508 = vpop.f32.mrb[0].mxu0
      %v509 = vadd.f32 0.0, %v508
      %v510 = vpop.f32.mrb[0].mxu0
      %511 = vmatprep.mubr.bf16.mxu0 0
      %512 = vmatmul.mubr.bf16.gmra.mrb[0].mxu0 %v458
      %v513 = vpop.f32.mrb[0].mxu0
      %v514 = vadd.f32 0.0, %v513
      %v515 = vpop.f32.mrb[0].mxu0
      %v516 = vpop.f32.mrb[0].mxu0
      %v517 = vadd.f32 0.0, %v516
      %v518 = vpop.f32.mrb[0].mxu0
      %519 = vmatprep.mubr.bf16.mxu0 0
      %520 = vmatmul.mubr.bf16.gmra.mrb[0].mxu0 %v461
      %v521 = vpop.f32.mrb[0].mxu0
      %v522 = vadd.f32 0.0, %v521
      %v523 = vpop.f32.mrb[0].mxu0
      %v524 = vpop.f32.mrb[0].mxu0
      %v525 = vadd.f32 0.0, %v524
      %v526 = vpop.f32.mrb[0].mxu0
      %527 = vdwg.mxu0
      %v528 = vadd.f32 %v422, %v498
      %v529 = vadd.f32 %v423, %v501
      %v530 = vadd.f32 %v424, %v506
      %v531 = vadd.f32 %v425, %v509
      %v532 = vadd.f32 %v426, %v514
      %v533 = vadd.f32 %v427, %v517
      %v534 = vadd.f32 %v428, %v522
      %v535 = vadd.f32 %v429, %v525
      %536 = vst [vmem:[#allocation2] sm:$0xff] %v528
      %537 = vst [vmem:[#allocation2 + $0x8] sm:$0xff] %v529
      %538 = vst [vmem:[#allocation2 + $0x10] sm:$0xff] %v530
      %539 = vst [vmem:[#allocation2 + $0x18] sm:$0xff] %v531
      %540 = vst [vmem:[#allocation2 + $0x20] sm:$0xff] %v532
      %541 = vst [vmem:[#allocation2 + $0x28] sm:$0xff] %v533
      %542 = vst [vmem:[#allocation2 + $0x30] sm:$0xff] %v534
      %543 = vst [vmem:[#allocation2 + $0x38] sm:$0xff] %v535
      %s544 = scalar_lea.vmem %s138, 8
      %v545 = vld [vmem:[%s544] sm:$0xf]
      %v546 = vld [vmem:[%s544 + $0x8] sm:$0xf]
      %v547 = vld [vmem:[%s544 + $0x10] sm:$0xf]
      %v548 = vld [vmem:[%s544 + $0x18] sm:$0xf]
      %v549 = vld [vmem:[%s544 + $0x20] sm:$0xf]
      %v550 = vld [vmem:[%s544 + $0x28] sm:$0xf]
      %v551 = vld [vmem:[%s544 + $0x30] sm:$0xf]
      %v552 = vld [vmem:[%s544 + $0x38] sm:$0xf]
      %v553 = vld [vmem:[#allocation2] sm:$0xff]
      %v554 = vld [vmem:[#allocation2 + $0x8] sm:$0xff]
      %v555 = vld [vmem:[#allocation2 + $0x10] sm:$0xff]
      %v556 = vld [vmem:[#allocation2 + $0x18] sm:$0xff]
      %v557 = vld [vmem:[#allocation2 + $0x20] sm:$0xff]
      %v558 = vld [vmem:[#allocation2 + $0x28] sm:$0xff]
      %v559 = vld [vmem:[#allocation2 + $0x30] sm:$0xff]
      %v560 = vld [vmem:[#allocation2 + $0x38] sm:$0xff]
      %s561 = scalar_lea.vmem %s1, 16
      %v562 = vld [vmem:[%s561] sm:$0xf]
      %v563 = vld [vmem:[%s561 + $0x4] sm:$0xf]
      %v572 = vunpack.c.l.b16 %v545
      %v573 = vunpack.c.l.b16 %v546
      %v574 = vunpack.c.l.b16 %v547
      %v575 = vunpack.c.l.b16 %v548
      %v576 = vunpack.c.l.b16 %v549
      %v577 = vunpack.c.l.b16 %v550
      %v578 = vunpack.c.l.b16 %v551
      %v579 = vunpack.c.l.b16 %v552
      %v580 = vpack.c.b16 %v573, %v572
      %v581 = vpack.c.b16 %v575, %v574
      %v582 = vpack.c.b16 %v577, %v576
      %v583 = vpack.c.b16 %v579, %v578
      %v586 = vunpack.c.l.b16 %v562
      %v587 = vunpack.c.l.b16 %v563
      %v588 = vpack.c.b16 %v587, %v586
      %v591 = vsel %vm197, %v580, 0
      %v594 = vsel %vm197, %v581, 0
      %v597 = vsel %vm197, %v582, 0
      %v600 = vsel %vm197, %v583, 0
      %602 = vmatprep.subr.bf16.mxu0 0
      %603 = vmatpush1.bf16.msra.mxu0 %v588
      %604 = vmatprep.subr.bf16.mxu0 0
      %605 = vmatpush1.bf16.msra.mxu0 0
      %606 = vmatprep.subr.bf16.mxu0 0
      %607 = vmatpush1.bf16.msra.mxu0 0
      %608 = vmatprep.subr.bf16.mxu0 0
      %609 = vmatpush1.bf16.msra.mxu0 0
      %610 = vmatprep.subr.bf16.mxu0 0
      %611 = vmatpush1.bf16.msra.mxu0 0
      %612 = vmatprep.subr.bf16.mxu0 0
      %613 = vmatpush1.bf16.msra.mxu0 0
      %614 = vmatprep.subr.bf16.mxu0 0
      %615 = vmatpush1.bf16.msra.mxu0 0
      %616 = vmatprep.subr.bf16.mxu0 0
      %617 = vmatpush1.bf16.msra.mxu0 0
      %618 = vmatprep.subr.bf16.mxu0 0
      %619 = vmatpush1.bf16.msra.mxu0 0
      %620 = vmatprep.subr.bf16.mxu0 0
      %621 = vmatpush1.bf16.msra.mxu0 0
      %622 = vmatprep.subr.bf16.mxu0 0
      %623 = vmatpush1.bf16.msra.mxu0 0
      %624 = vmatprep.subr.bf16.mxu0 0
      %625 = vmatpush1.bf16.msra.mxu0 0
      %626 = vmatprep.subr.bf16.mxu0 0
      %627 = vmatpush1.bf16.msra.mxu0 0
      %628 = vmatprep.subr.bf16.mxu0 0
      %629 = vmatpush1.bf16.msra.mxu0 0
      %630 = vmatprep.subr.bf16.mxu0 0
      %631 = vmatpush1.bf16.msra.mxu0 0
      %632 = vmatprep.subr.bf16.mxu0 0
      %633 = vmatpush1.bf16.msra.mxu0 0
      %634 = vmatprep.mubr.bf16.mxu0 0
      %635 = vmatmul.mubr.bf16.gmra.mrb[0].mxu0 %v591
      %v636 = vpop.f32.mrb[0].mxu0
      %v637 = vadd.f32 0.0, %v636
      %v638 = vpop.f32.mrb[0].mxu0
      %v639 = vpop.f32.mrb[0].mxu0
      %v640 = vadd.f32 0.0, %v639
      %v641 = vpop.f32.mrb[0].mxu0
      %642 = vmatprep.mubr.bf16.mxu0 0
      %643 = vmatmul.mubr.bf16.gmra.mrb[0].mxu0 %v594
      %v644 = vpop.f32.mrb[0].mxu0
      %v645 = vadd.f32 0.0, %v644
      %v646 = vpop.f32.mrb[0].mxu0
      %v647 = vpop.f32.mrb[0].mxu0
      %v648 = vadd.f32 0.0, %v647
      %v649 = vpop.f32.mrb[0].mxu0
      %650 = vmatprep.mubr.bf16.mxu0 0
      %651 = vmatmul.mubr.bf16.gmra.mrb[0].mxu0 %v597
      %v652 = vpop.f32.mrb[0].mxu0
      %v653 = vadd.f32 0.0, %v652
      %v654 = vpop.f32.mrb[0].mxu0
      %v655 = vpop.f32.mrb[0].mxu0
      %v656 = vadd.f32 0.0, %v655
      %v657 = vpop.f32.mrb[0].mxu0
      %658 = vmatprep.mubr.bf16.mxu0 0
      %659 = vmatmul.mubr.bf16.gmra.mrb[0].mxu0 %v600
      %v660 = vpop.f32.mrb[0].mxu0
      %v661 = vadd.f32 0.0, %v660
      %v662 = vpop.f32.mrb[0].mxu0
      %v663 = vpop.f32.mrb[0].mxu0
      %v664 = vadd.f32 0.0, %v663
      %v665 = vpop.f32.mrb[0].mxu0
      %666 = vdwg.mxu0
      %v667 = vadd.f32 %v553, %v637
      %v668 = vadd.f32 %v554, %v640
      %v669 = vadd.f32 %v555, %v645
      %v670 = vadd.f32 %v556, %v648
      %v671 = vadd.f32 %v557, %v653
      %v672 = vadd.f32 %v558, %v656
      %v673 = vadd.f32 %v559, %v661
      %v674 = vadd.f32 %v560, %v664
      %675 = vst [vmem:[#allocation2] sm:$0xff] %v667
      %676 = vst [vmem:[#allocation2 + $0x8] sm:$0xff] %v668
      %677 = vst [vmem:[#allocation2 + $0x10] sm:$0xff] %v669
      %678 = vst [vmem:[#allocation2 + $0x18] sm:$0xff] %v670
      %679 = vst [vmem:[#allocation2 + $0x20] sm:$0xff] %v671
      %680 = vst [vmem:[#allocation2 + $0x28] sm:$0xff] %v672
      %681 = vst [vmem:[#allocation2 + $0x30] sm:$0xff] %v673
      %682 = vst [vmem:[#allocation2 + $0x38] sm:$0xff] %v674
      %v683 = vld [vmem:[%s544] sm:$0xf]
      %v684 = vld [vmem:[%s544 + $0x4] sm:$0x1]
      %v685 = vld [vmem:[%s544 + $0x8] sm:$0xf]
      %v686 = vld [vmem:[%s544 + $0xc] sm:$0x1]
      %v687 = vld [vmem:[%s544 + $0x10] sm:$0xf]
      %v688 = vld [vmem:[%s544 + $0x14] sm:$0x1]
      %v689 = vld [vmem:[%s544 + $0x18] sm:$0xf]
      %v690 = vld [vmem:[%s544 + $0x1c] sm:$0x1]
      %v691 = vld [vmem:[%s544 + $0x20] sm:$0xf]
      %v692 = vld [vmem:[%s544 + $0x24] sm:$0x1]
      %v693 = vld [vmem:[%s544 + $0x28] sm:$0xf]
      %v694 = vld [vmem:[%s544 + $0x2c] sm:$0x1]
      %v695 = vld [vmem:[%s544 + $0x30] sm:$0xf]
      %v696 = vld [vmem:[%s544 + $0x34] sm:$0x1]
      %v697 = vld [vmem:[%s544 + $0x38] sm:$0xf]
      %v698 = vld [vmem:[%s544 + $0x3c] sm:$0x1]
      %v700 = vshrl.u32 %v683, 16
      %v702 = vrot.slane %v700, 4
      %v703 = vshll.u32 %v683, 16
      %v705 = vrot.slane %v703, 5
      %v706 = vor.u32 %v702, %v705
      %v707 = vrot.slane %v706, 4
      %v709 = vshll.u32 %v684, 16
      %v711 = vrot.slane %v709, 5
      %v712 = vsel %vm309, %v707, %v711
      %v714 = vshrl.u32 %v685, 16
      %v716 = vrot.slane %v714, 4
      %v717 = vshll.u32 %v685, 16
      %v719 = vrot.slane %v717, 5
      %v720 = vor.u32 %v716, %v719
      %v721 = vrot.slane %v720, 4
      %v723 = vshll.u32 %v686, 16
      %v725 = vrot.slane %v723, 5
      %v726 = vsel %vm309, %v721, %v725
      %v728 = vshrl.u32 %v687, 16
      %v730 = vrot.slane %v728, 4
      %v731 = vshll.u32 %v687, 16
      %v733 = vrot.slane %v731, 5
      %v734 = vor.u32 %v730, %v733
      %v735 = vrot.slane %v734, 4
      %v737 = vshll.u32 %v688, 16
      %v739 = vrot.slane %v737, 5
      %v740 = vsel %vm309, %v735, %v739
      %v742 = vshrl.u32 %v689, 16
      %v744 = vrot.slane %v742, 4
      %v745 = vshll.u32 %v689, 16
      %v747 = vrot.slane %v745, 5
      %v748 = vor.u32 %v744, %v747
      %v749 = vrot.slane %v748, 4
      %v751 = vshll.u32 %v690, 16
      %v753 = vrot.slane %v751, 5
      %v754 = vsel %vm309, %v749, %v753
      %v756 = vshrl.u32 %v691, 16
      %v758 = vrot.slane %v756, 4
      %v759 = vshll.u32 %v691, 16
      %v761 = vrot.slane %v759, 5
      %v762 = vor.u32 %v758, %v761
      %v763 = vrot.slane %v762, 4
      %v765 = vshll.u32 %v692, 16
      %v767 = vrot.slane %v765, 5
      %v768 = vsel %vm309, %v763, %v767
      %v770 = vshrl.u32 %v693, 16
      %v772 = vrot.slane %v770, 4
      %v773 = vshll.u32 %v693, 16
      %v775 = vrot.slane %v773, 5
      %v776 = vor.u32 %v772, %v775
      %v777 = vrot.slane %v776, 4
      %v779 = vshll.u32 %v694, 16
      %v781 = vrot.slane %v779, 5
      %v782 = vsel %vm309, %v777, %v781
      %v784 = vshrl.u32 %v695, 16
      %v786 = vrot.slane %v784, 4
      %v787 = vshll.u32 %v695, 16
      %v789 = vrot.slane %v787, 5
      %v790 = vor.u32 %v786, %v789
      %v791 = vrot.slane %v790, 4
      %v793 = vshll.u32 %v696, 16
      %v795 = vrot.slane %v793, 5
      %v796 = vsel %vm309, %v791, %v795
      %v798 = vshrl.u32 %v697, 16
      %v800 = vrot.slane %v798, 4
      %v801 = vshll.u32 %v697, 16
      %v803 = vrot.slane %v801, 5
      %v804 = vor.u32 %v800, %v803
      %v805 = vrot.slane %v804, 4
      %v807 = vshll.u32 %v698, 16
      %v809 = vrot.slane %v807, 5
      %v810 = vsel %vm309, %v805, %v809
      %v811 = vld [vmem:[#allocation2] sm:$0xff]
      %v812 = vld [vmem:[#allocation2 + $0x8] sm:$0xff]
      %v813 = vld [vmem:[#allocation2 + $0x10] sm:$0xff]
      %v814 = vld [vmem:[#allocation2 + $0x18] sm:$0xff]
      %v815 = vld [vmem:[#allocation2 + $0x20] sm:$0xff]
      %v816 = vld [vmem:[#allocation2 + $0x28] sm:$0xff]
      %v817 = vld [vmem:[#allocation2 + $0x30] sm:$0xff]
      %v818 = vld [vmem:[#allocation2 + $0x38] sm:$0xff]
      %s819 = scalar_lea.vmem %s1, 24
      %v820 = vld [vmem:[%s819] sm:$0xf]
      %v821 = vld [vmem:[%s819 + $0x4] sm:$0xf]
      %v822 = vunpack.c.l.b16 %v712
      %v823 = vunpack.c.l.b16 %v726
      %v824 = vunpack.c.l.b16 %v740
      %v825 = vunpack.c.l.b16 %v754
      %v826 = vunpack.c.l.b16 %v768
      %v827 = vunpack.c.l.b16 %v782
      %v828 = vunpack.c.l.b16 %v796
      %v829 = vunpack.c.l.b16 %v810
      %v830 = vpack.c.b16 %v823, %v822
      %v831 = vpack.c.b16 %v825, %v824
      %v832 = vpack.c.b16 %v827, %v826
      %v833 = vpack.c.b16 %v829, %v828
      %v836 = vunpack.c.l.b16 %v820
      %v837 = vunpack.c.l.b16 %v821
      %v838 = vpack.c.b16 %v837, %v836
      %v841 = vsel %vm197, %v830, 0
      %v844 = vsel %vm197, %v831, 0
      %v847 = vsel %vm197, %v832, 0
      %v850 = vsel %vm197, %v833, 0
      %852 = vmatprep.subr.bf16.mxu0 0
      %853 = vmatpush1.bf16.msra.mxu0 %v838
      %854 = vmatprep.subr.bf16.mxu0 0
      %855 = vmatpush1.bf16.msra.mxu0 0
      %856 = vmatprep.subr.bf16.mxu0 0
      %857 = vmatpush1.bf16.msra.mxu0 0
      %858 = vmatprep.subr.bf16.mxu0 0
      %859 = vmatpush1.bf16.msra.mxu0 0
      %860 = vmatprep.subr.bf16.mxu0 0
      %861 = vmatpush1.bf16.msra.mxu0 0
      %862 = vmatprep.subr.bf16.mxu0 0
      %863 = vmatpush1.bf16.msra.mxu0 0
      %864 = vmatprep.subr.bf16.mxu0 0
      %865 = vmatpush1.bf16.msra.mxu0 0
      %866 = vmatprep.subr.bf16.mxu0 0
      %867 = vmatpush1.bf16.msra.mxu0 0
      %868 = vmatprep.subr.bf16.mxu0 0
      %869 = vmatpush1.bf16.msra.mxu0 0
      %870 = vmatprep.subr.bf16.mxu0 0
      %871 = vmatpush1.bf16.msra.mxu0 0
      %872 = vmatprep.subr.bf16.mxu0 0
      %873 = vmatpush1.bf16.msra.mxu0 0
      %874 = vmatprep.subr.bf16.mxu0 0
      %875 = vmatpush1.bf16.msra.mxu0 0
      %876 = vmatprep.subr.bf16.mxu0 0
      %877 = vmatpush1.bf16.msra.mxu0 0
      %878 = vmatprep.subr.bf16.mxu0 0
      %879 = vmatpush1.bf16.msra.mxu0 0
      %880 = vmatprep.subr.bf16.mxu0 0
      %881 = vmatpush1.bf16.msra.mxu0 0
      %882 = vmatprep.subr.bf16.mxu0 0
      %883 = vmatpush1.bf16.msra.mxu0 0
      %884 = vmatprep.mubr.bf16.mxu0 0
      %885 = vmatmul.mubr.bf16.gmra.mrb[0].mxu0 %v841
      %v886 = vpop.f32.mrb[0].mxu0
      %v887 = vadd.f32 0.0, %v886
      %v888 = vpop.f32.mrb[0].mxu0
      %v889 = vpop.f32.mrb[0].mxu0
      %v890 = vadd.f32 0.0, %v889
      %v891 = vpop.f32.mrb[0].mxu0
      %892 = vmatprep.mubr.bf16.mxu0 0
      %893 = vmatmul.mubr.bf16.gmra.mrb[0].mxu0 %v844
      %v894 = vpop.f32.mrb[0].mxu0
      %v895 = vadd.f32 0.0, %v894
      %v896 = vpop.f32.mrb[0].mxu0
      %v897 = vpop.f32.mrb[0].mxu0
      %v898 = vadd.f32 0.0, %v897
      %v899 = vpop.f32.mrb[0].mxu0
      %900 = vmatprep.mubr.bf16.mxu0 0
      %901 = vmatmul.mubr.bf16.gmra.mrb[0].mxu0 %v847
      %v902 = vpop.f32.mrb[0].mxu0
      %v903 = vadd.f32 0.0, %v902
      %v904 = vpop.f32.mrb[0].mxu0
      %v905 = vpop.f32.mrb[0].mxu0
      %v906 = vadd.f32 0.0, %v905
      %v907 = vpop.f32.mrb[0].mxu0
      %908 = vmatprep.mubr.bf16.mxu0 0
      %909 = vmatmul.mubr.bf16.gmra.mrb[0].mxu0 %v850
      %v910 = vpop.f32.mrb[0].mxu0
      %v911 = vadd.f32 0.0, %v910
      %v912 = vpop.f32.mrb[0].mxu0
      %v913 = vpop.f32.mrb[0].mxu0
      %v914 = vadd.f32 0.0, %v913
      %v915 = vpop.f32.mrb[0].mxu0
      %916 = vdwg.mxu0
      %v917 = vadd.f32 %v811, %v887
      %v918 = vadd.f32 %v812, %v890
      %v919 = vadd.f32 %v813, %v895
      %v920 = vadd.f32 %v814, %v898
      %v921 = vadd.f32 %v815, %v903
      %v922 = vadd.f32 %v816, %v906
      %v923 = vadd.f32 %v817, %v911
      %v924 = vadd.f32 %v818, %v914
      %925 = vst [vmem:[#allocation2] sm:$0xff] %v917
      %926 = vst [vmem:[#allocation2 + $0x8] sm:$0xff] %v918
      %927 = vst [vmem:[#allocation2 + $0x10] sm:$0xff] %v919
      %928 = vst [vmem:[#allocation2 + $0x18] sm:$0xff] %v920
      %929 = vst [vmem:[#allocation2 + $0x20] sm:$0xff] %v921
      %930 = vst [vmem:[#allocation2 + $0x28] sm:$0xff] %v922
      %931 = vst [vmem:[#allocation2 + $0x30] sm:$0xff] %v923
      %932 = vst [vmem:[#allocation2 + $0x38] sm:$0xff] %v924
      %v933 = vld [vmem:[#allocation2] sm:$0xff]
      %v934 = vld [vmem:[#allocation2 + $0x8] sm:$0xff]
      %v935 = vld [vmem:[#allocation2 + $0x10] sm:$0xff]
      %v936 = vld [vmem:[#allocation2 + $0x18] sm:$0xff]
      %v937 = vld [vmem:[#allocation2 + $0x20] sm:$0xff]
      %v938 = vld [vmem:[#allocation2 + $0x28] sm:$0xff]
      %v939 = vld [vmem:[#allocation2 + $0x30] sm:$0xff]
      %v940 = vld [vmem:[#allocation2 + $0x38] sm:$0xff]
      %v941 = vadd.f32 %v933, %v934
      %v942 = vadd.f32 %v941, %v935
      %v943 = vadd.f32 %v942, %v936
      %v944 = vadd.f32 %v943, %v937
      %v945 = vadd.f32 %v944, %v938
      %v946 = vadd.f32 %v945, %v939
      %v947 = vadd.f32 %v946, %v940
      %v948 = vrot.slane %v947, 4
      %v949 = vadd.f32 %v947, %v948
      %v950 = vrot.slane %v949, 2
      %v951 = vadd.f32 %v949, %v950
      %v952 = vrot.slane %v951, 1
      %v953 = vadd.f32 %v951, %v952
      %v954 = vmul.f32 %v953, 0.015625
      %v955 = vsub.f32 %v933, %v954
      %v956 = vsub.f32 %v934, %v954
      %v957 = vsub.f32 %v935, %v954
      %v958 = vsub.f32 %v936, %v954
      %v959 = vsub.f32 %v937, %v954
      %v960 = vsub.f32 %v938, %v954
      %v961 = vsub.f32 %v939, %v954
      %v962 = vsub.f32 %v940, %v954
      %v963 = vmul.f32 %v955, %v955
      %v964 = vmul.f32 %v956, %v956
      %v965 = vmul.f32 %v957, %v957
      %v966 = vmul.f32 %v958, %v958
      %v967 = vmul.f32 %v959, %v959
      %v968 = vmul.f32 %v960, %v960
      %v969 = vmul.f32 %v961, %v961
      %v970 = vmul.f32 %v962, %v962
      %v971 = vadd.f32 %v963, %v964
      %v972 = vadd.f32 %v971, %v965
      %v973 = vadd.f32 %v972, %v966
      %v974 = vadd.f32 %v973, %v967
      %v975 = vadd.f32 %v974, %v968
      %v976 = vadd.f32 %v975, %v969
      %v977 = vadd.f32 %v976, %v970
      %v978 = vrot.slane %v977, 4
      %v979 = vadd.f32 %v977, %v978
      %v980 = vrot.slane %v979, 2
      %v981 = vadd.f32 %v979, %v980
      %v982 = vrot.slane %v981, 1
      %v983 = vadd.f32 %v981, %v982
      %v984 = vmul.f32 %v983, 0.015625
      %v985 = vadd.f32 %v984, 1e-05
      %v986 = vrsqrt.pop %v985
      %v987 = vmul.f32 %v955, %v986
      %v988 = vmul.f32 %v956, %v986
      %v989 = vmul.f32 %v957, %v986
      %v990 = vmul.f32 %v958, %v986
      %v991 = vmul.f32 %v959, %v986
      %v992 = vmul.f32 %v960, %v986
      %v993 = vmul.f32 %v961, %v986
      %v994 = vmul.f32 %v962, %v986
      %vm995 = vcmp.gt.f32.partialorder %v987, 0.0
      %vm996 = vcmp.gt.f32.partialorder %v988, 0.0
      %vm997 = vcmp.gt.f32.partialorder %v989, 0.0
      %vm998 = vcmp.gt.f32.partialorder %v990, 0.0
      %vm999 = vcmp.gt.f32.partialorder %v991, 0.0
      %vm1000 = vcmp.gt.f32.partialorder %v992, 0.0
      %vm1001 = vcmp.gt.f32.partialorder %v993, 0.0
      %vm1002 = vcmp.gt.f32.partialorder %v994, 0.0
      %v1003 = vmul.f32 %v987, 0.2
      %v1004 = vmul.f32 %v988, 0.2
      %v1005 = vmul.f32 %v989, 0.2
      %v1006 = vmul.f32 %v990, 0.2
      %v1007 = vmul.f32 %v991, 0.2
      %v1008 = vmul.f32 %v992, 0.2
      %v1009 = vmul.f32 %v993, 0.2
      %v1010 = vmul.f32 %v994, 0.2
      %v1011 = vsel %vm995, %v987, %v1003
      %v1012 = vsel %vm996, %v988, %v1004
      %v1013 = vsel %vm997, %v989, %v1005
      %v1014 = vsel %vm998, %v990, %v1006
      %v1015 = vsel %vm999, %v991, %v1007
      %v1016 = vsel %vm1000, %v992, %v1008
      %v1017 = vsel %vm1001, %v993, %v1009
      %v1018 = vsel %vm1002, %v994, %v1010
      %vm1019 = vcmask 64512
      %1020 = vst.msk [vmem:[%s143] sm:$0xff] %vm1019, %v1011
      %1021 = vst.msk [vmem:[%s143 + $0x8] sm:$0xff] %vm1019, %v1012
      %1022 = vst.msk [vmem:[%s143 + $0x10] sm:$0xff] %vm1019, %v1013
      %1023 = vst.msk [vmem:[%s143 + $0x18] sm:$0xff] %vm1019, %v1014
      %1024 = vst.msk [vmem:[%s143 + $0x20] sm:$0xff] %vm1019, %v1015
      %1025 = vst.msk [vmem:[%s143 + $0x28] sm:$0xff] %vm1019, %v1016
      %1026 = vst.msk [vmem:[%s143 + $0x30] sm:$0xff] %vm1019, %v1017
      %1027 = vst.msk [vmem:[%s143 + $0x38] sm:$0xff] %vm1019, %v1018
      %p1028 = scmp.lt.s32.totalorder %s13, 1
      %s1029 = scalar_select %p1028, %s13, 1
      %s1030 = smul.addr %s1029, 8
      %s1031 = smul.addr %s1030, 8
      %s1032 = scalar_lea.vmem %s2, %s1031
      // Predicated region
      $region29: #{conv_block.1} parent=27 // pred_check
        %p1033 = pneg %p78
      $region30: #{conv_block.1} parent=27 // pred_check_branch
        %1035 = sbr.rel (%p1033) target = $region32
      $region31: #{conv_block.1} parent=27 // pred_region
        _
      $region32: #{conv_block.1} parent=27 // pred_fallthru
        _
    $region28: #{conv_block.1} parent=5 // pred_fallthru
      _
    %p1036 = scmp.le.s32.totalorder 2, %s8
    // Predicated region
    $region33: #{conv_block.1} parent=5 // pred_check
      %p1037 = pneg %p1036
    $region34: #{conv_block.1} parent=5 // pred_check_branch
      %1039 = sbr.rel (%p1037) target = $region36
    $region35: #{conv_block.1} parent=5 // pred_region
      %s1040 = ssub.s32 %s8, 2
      // Predicated region
      $region37: #{conv_block.1} parent=35 // pred_check
        %p1041 = pneg %p84
      $region38: #{conv_block.1} parent=35 // pred_check_branch
        %1043 = sbr.rel (%p1041) target = $region40
      $region39: #{conv_block.1} parent=35 // pred_region
        %p1044 = scmp.lt.s32.totalorder %s14, 1
        %s1045 = scalar_select %p1044, %s14, 1
        %s1046 = smul.addr %s1045, 8
        %s1047 = smul.addr %s1046, 8
        %s1048 = scalar_lea.vmem %s2, %s1047
      $region40: #{conv_block.1} parent=35 // pred_fallthru
        _
    $region36: #{conv_block.1} parent=5 // pred_fallthru
      _
  $region6: #{conv_block.1} parent=0 // loop_footer
    %s12 = sadd.s32 1, %s8
  $region7: #{conv_block.1} parent=0 // loop_footer_branch
    %7 = sbr.rel target = $region3
  $region8: #{conv_block.1} parent=0 // loop_exit
    _

</llo_original>
